<compile_context>
chip_gen: v6e
topology: v6e:2x2x1
jax: 0.10.0
libtpu: 0.0.40
codegen_flags: <defaults>
</compile_context>

<pallas_src>
import functools

import jax
import jax.numpy as jnp
from jax import lax
from jax.experimental import pallas as pl
from jax.experimental.pallas import tpu as pltpu


def _gaussian_1d(sigma):
    """Normalized 1-D Gaussian taps g (3,), so the 2-D kernel is outer(g, g)."""
    g = jnp.exp(-(jnp.arange(-1, 2, dtype=jnp.float32) ** 2) / (2.0 * sigma ** 2))
    return g / jnp.sum(g)


def _blur_kernel(g1_ref, masks_ref, x_ref, o_ref, *, H, W):
    """Separable depthwise 3x3 blur, zero 'same' pad, flattened (rows, H*W) planes.

    g1_ref:    SMEM (1,)      f32 -- center tap weight g[1]
    masks_ref: VMEM (4, H*W)  f32 -- weight-scaled boundary masks
                                     [0]=g0*(w>=1) [1]=g2*(w<=W-2)
                                     [2]=g0*(h>=1) [3]=g2*(h<=H-2)
    x_ref:     VMEM (blk, H*W)    -- blk independent image planes (lane-dense)
    o_ref:     VMEM (blk, H*W)
    """
    HW = H * W
    x = x_ref[...].astype(jnp.float32)              # cast once per tile
    g1 = g1_ref[0]
    m = masks_ref[...]                              # (4, HW) f32, tiny
    mL, mR, mU, mD = m[0:1, :], m[1:2, :], m[2:3, :], m[3:4, :]

    # Horizontal pass: y[p] = g0*x[p-1]*(w>=1) + g1*x[p] + g2*x[p+1]*(w<=W-2)
    y = g1 * x
    y = y + mL * pltpu.roll(x, shift=1, axis=1)       # rolled[p] = x[p-1]
    y = y + mR * pltpu.roll(x, shift=HW - 1, axis=1)  # rolled[p] = x[p+1]

    # Vertical pass: out[p] = g0*y[p-W]*(h>=1) + g1*y[p] + g2*y[p+W]*(h<=H-2)
    out = g1 * y
    out = out + mU * pltpu.roll(y, shift=W, axis=1)       # rolled[p] = y[p-W]
    out = out + mD * pltpu.roll(y, shift=HW - W, axis=1)  # rolled[p] = y[p+W]

    o_ref[...] = out.astype(o_ref.dtype)


def _round_up(v, m):
    return ((v + m - 1) // m) * m


def _choose_block(nc, hw, itemsize):
    """Pick a sublane-aligned row-block size with VMEM-budget awareness."""
    try:
        vmem_cap = int(pltpu.get_tpu_info().vmem_capacity_bytes)
    except Exception:
        vmem_cap = 64 << 20                          # conservative (v7x per-TC)

    # Per plane-row VMEM cost: in+out double-buffered (x.dtype) plus ~6 f32
    # full-tile temporaries inside the kernel (x, y, out, roll results).
    per_row = hw * (4 * itemsize + 6 * 4)
    budget = max(vmem_cap // 2, 8 << 20)
    blk_cap = max(8, (budget // max(per_row, 1)) // 8 * 8)
    blk_target = max(8, ((4 << 20) // max(hw * itemsize, 1)) // 8 * 8)
    blk = min(blk_cap, blk_target)

    if nc < 8:
        return nc, vmem_cap                          # full-dim block is always legal
    if nc <= blk:
        # Small/medium workload: try to produce >=2 grid steps so the
        # "parallel" axis actually splits across v7x's two TensorCores.
        half = _round_up(pl.cdiv(nc, 2), 8)
        blk = half if half < nc else nc
    else:
        blk = max(8, min(blk, (nc // 8) * 8 if nc >= 8 else nc))
    return blk, vmem_cap


def _blur_pallas(x, g):
    """x: (N, C, H, W); g: (3,) f32 1-D Gaussian taps. Returns blurred x."""
    N, C, H, W = x.shape
    nc, hw = N * C, H * W
    x2 = x.reshape(nc, hw)                           # free view of contiguous NCHW

    blk, vmem_cap = _choose_block(nc, hw, x.dtype.itemsize)
    grid = (pl.cdiv(nc, blk),)

    # Precomputed, weight-scaled boundary masks (built once in the wrapper,
    # not per grid step): zero the wrap-around taps at plane edges.
    g = g.astype(jnp.float32)
    flat = jnp.arange(hw, dtype=jnp.int32)
    w_idx = flat % W
    h_idx = flat // W
    zero = jnp.float32(0.0)
    masks = jnp.stack([
        jnp.where(w_idx >= 1, g[0], zero),           # left tap
        jnp.where(w_idx <= W - 2, g[2], zero),       # right tap
        jnp.where(h_idx >= 1, g[0], zero),           # up tap
        jnp.where(h_idx <= H - 2, g[2], zero),       # down tap
    ], axis=0)                                       # (4, hw) f32

    # Explicit scoped-VMEM budget with headroom, capped below physical VMEM.
    est = blk * hw * (4 * x.dtype.itemsize + 6 * 4) + 2 * masks.size * 4 + (2 << 20)
    vmem_limit = int(min(max(2 * est, 32 << 20), int(vmem_cap * 0.9)))

    out2 = pl.pallas_call(
        functools.partial(_blur_kernel, H=H, W=W),
        out_shape=jax.ShapeDtypeStruct((nc, hw), x.dtype),
        grid=grid,
        in_specs=[
            pl.BlockSpec(memory_space=pltpu.MemorySpace.SMEM),   # (1,) center weight
            pl.BlockSpec((4, hw), lambda i: (0, 0)),             # boundary masks
            pl.BlockSpec((blk, hw), lambda i: (i, 0)),           # image planes
        ],
        out_specs=pl.BlockSpec((blk, hw), lambda i: (i, 0)),
        compiler_params=pltpu.CompilerParams(
            dimension_semantics=("parallel",),                   # megacore split
            vmem_limit_bytes=vmem_limit,
        ),
    )(g[1:2], masks, x2)
    return out2.reshape(N, C, H, W)


@jax.jit
def random_apply_blur(x, g, apply_flag):
    """RandomApply: if apply_flag run the Pallas blur, else return x untouched.

    The decision lives in a lax.cond outside the kernel so the skip path moves
    zero bytes through HBM/VMEM.
    """
    return lax.cond(apply_flag,
                    lambda t: _blur_pallas(t, g),
                    lambda t: t,
                    x)


def _reference(x, g, apply_flag):
    """Pure-JAX reference: depthwise 3x3 'same' conv with weight outer(g, g)."""
    C = x.shape[1]
    weight = jnp.outer(g, g).astype(jnp.float32)
    w4 = jnp.broadcast_to(weight[None, None, :, :], (C, 1, 3, 3))
    blurred = lax.conv_general_dilated(
        x.astype(jnp.float32), w4, window_strides=(1, 1), padding="SAME",
        dimension_numbers=("NCHW", "OIHW", "NCHW"),
        feature_group_count=C).astype(x.dtype)
    return jnp.where(apply_flag, blurred, x)


if __name__ == "__main__":
    key = jax.random.PRNGKey(0)
    kx, kp, ks = jax.random.split(key, 3)

    p = 0.8                                          # RandomApply probability (demo)
    x = jax.random.normal(kx, (2, 4, 16, 16), dtype=jnp.float32)

    # GaussianBlur((3,3), sigma=(1.0, 2.0)) samples sigma per call; the host-side
    # random.random() draw is replaced by a deterministic jax.random draw.
    # TODO(synk): torchvision's GaussianBlur uses reflect padding; zero 'same'
    # padding is used here (matches the in-file reference, borders may differ).
    sigma = jax.random.uniform(ks, (), minval=1.0, maxval=2.0)
    g = _gaussian_1d(sigma)                          # (3,) 1-D taps, outer(g,g) = 3x3
    u = jax.random.uniform(kp, ())
    apply_flag = (u <= p)                            # apply iff u <= p (skip iff u > p)

    out = jax.block_until_ready(random_apply_blur(x, g, apply_flag))
    ref = _reference(x, g, apply_flag)
    assert out.shape == x.shape and out.dtype == x.dtype
    assert jnp.allclose(out, ref, atol=1e-5, rtol=1e-5), "mismatch vs reference"

    # Exercise both branches explicitly.
    out_id = jax.block_until_ready(random_apply_blur(x, g, jnp.asarray(False)))
    assert jnp.allclose(out_id, x), "identity (skip) branch mismatch"

    out_ap = jax.block_until_ready(random_apply_blur(x, g, jnp.asarray(True)))
    ref_ap = _reference(x, g, jnp.asarray(True))
    assert jnp.allclose(out_ap, ref_ap, atol=1e-5, rtol=1e-5), "blur branch mismatch"

    print("KERNEL_OK")
</pallas_src>

<mosaic_0001>
module attributes {stable_mosaic.version = 11 : i64} {
  func.func @_blur_kernel(%arg0: i32, %arg1: memref<1xf32, #tpu.memory_space<smem>>, %arg2: memref<4x256xf32, #tpu.memory_space<vmem>>, %arg3: memref<8x256xf32, #tpu.memory_space<vmem>>, %arg4: memref<8x256xf32, #tpu.memory_space<vmem>>) attributes {dimension_semantics = [#tpu.dimension_semantics<parallel>], iteration_bounds = array<i64: 1>, scalar_prefetch = 0 : i64, scratch_operands = 0 : i64, tpu.core_type = #tpu.core_type<tc>, window_params = [{transform_indices = @transform_0, window_bounds = array<i64: 1>}, {pipeline_mode = #tpu.pipeline_mode<synchronous>, transform_indices = @transform_1, window_bounds = array<i64: 4, 256>}, {transform_indices = @transform_2, window_bounds = array<i64: 8, 256>}, {transform_indices = @transform_3, window_bounds = array<i64: 8, 256>}]} {
    %c0 = arith.constant 0 : index
    %c0_0 = arith.constant 0 : index
    %0 = vector.load %arg3[%c0, %c0_0] : memref<8x256xf32, #tpu.memory_space<vmem>>, vector<8x256xf32>
    %c0_1 = arith.constant 0 : index
    %1 = memref.load %arg1[%c0_1] : memref<1xf32, #tpu.memory_space<smem>>
    %c0_2 = arith.constant 0 : index
    %c0_3 = arith.constant 0 : index
    %2 = vector.load %arg2[%c0_2, %c0_3] : memref<4x256xf32, #tpu.memory_space<vmem>>, vector<4x256xf32>
    %3 = vector.extract_strided_slice %2 {offsets = [0, 0], sizes = [1, 256], strides = [1, 1]} : vector<4x256xf32> to vector<1x256xf32>
    %4 = vector.extract_strided_slice %2 {offsets = [1, 0], sizes = [1, 256], strides = [1, 1]} : vector<4x256xf32> to vector<1x256xf32>
    %5 = vector.extract_strided_slice %2 {offsets = [2, 0], sizes = [1, 256], strides = [1, 1]} : vector<4x256xf32> to vector<1x256xf32>
    %6 = vector.extract_strided_slice %2 {offsets = [3, 0], sizes = [1, 256], strides = [1, 1]} : vector<4x256xf32> to vector<1x256xf32>
    %7 = vector.broadcast %1 : f32 to vector<8x256xf32>
    %8 = arith.mulf %7, %0 : vector<8x256xf32>
    %c1_i32 = arith.constant 1 : i32
    %9 = tpu.dynamic_rotate %0 by %c1_i32 dim 1 : vector<8x256xf32>, i32 -> vector<8x256xf32>
    %10 = vector.broadcast %3 : vector<1x256xf32> to vector<8x256xf32>
    %11 = arith.mulf %10, %9 : vector<8x256xf32>
    %12 = arith.addf %8, %11 : vector<8x256xf32>
    %c255_i32 = arith.constant 255 : i32
    %13 = tpu.dynamic_rotate %0 by %c255_i32 dim 1 : vector<8x256xf32>, i32 -> vector<8x256xf32>
    %14 = vector.broadcast %4 : vector<1x256xf32> to vector<8x256xf32>
    %15 = arith.mulf %14, %13 : vector<8x256xf32>
    %16 = arith.addf %12, %15 : vector<8x256xf32>
    %17 = vector.broadcast %1 : f32 to vector<8x256xf32>
    %18 = arith.mulf %17, %16 : vector<8x256xf32>
    %c16_i32 = arith.constant 16 : i32
    %19 = tpu.dynamic_rotate %16 by %c16_i32 dim 1 : vector<8x256xf32>, i32 -> vector<8x256xf32>
    %20 = vector.broadcast %5 : vector<1x256xf32> to vector<8x256xf32>
    %21 = arith.mulf %20, %19 : vector<8x256xf32>
    %22 = arith.addf %18, %21 : vector<8x256xf32>
    %c240_i32 = arith.constant 240 : i32
    %23 = tpu.dynamic_rotate %16 by %c240_i32 dim 1 : vector<8x256xf32>, i32 -> vector<8x256xf32>
    %24 = vector.broadcast %6 : vector<1x256xf32> to vector<8x256xf32>
    %25 = arith.mulf %24, %23 : vector<8x256xf32>
    %26 = arith.addf %22, %25 : vector<8x256xf32>
    %c0_4 = arith.constant 0 : index
    %c0_5 = arith.constant 0 : index
    %27 = vector.load %arg4[%c0_4, %c0_5] : memref<8x256xf32, #tpu.memory_space<vmem>>, vector<8x256xf32>
    tpu.vector_store %arg4[%c0_4, %c0_5], %26 {strides = array<i32>} : memref<8x256xf32, #tpu.memory_space<vmem>>, vector<8x256xf32>,
    return
  }
  func.func @transform_0(%arg0: i32) -> i32 {
    %c0_i32 = arith.constant 0 : i32
    %c0_i32_0 = arith.constant 0 : i32
    return %c0_i32 : i32
  }
  func.func @transform_1(%arg0: i32) -> (i32, i32) {
    %c0_i32 = arith.constant 0 : i32
    %c0_i32_0 = arith.constant 0 : i32
    %c0_i32_1 = arith.constant 0 : i32
    return %c0_i32, %c0_i32_0 : i32, i32
  }
  func.func @transform_2(%arg0: i32) -> (i32, i32) {
    %c0_i32 = arith.constant 0 : i32
    %c0_i32_0 = arith.constant 0 : i32
    return %arg0, %c0_i32 : i32, i32
  }
  func.func @transform_3(%arg0: i32) -> (i32, i32) {
    %c0_i32 = arith.constant 0 : i32
    %c0_i32_0 = arith.constant 0 : i32
    return %arg0, %c0_i32 : i32, i32
  }
}

</mosaic_0001>

<llo_original>
// kernel: branch_1_fun.1
$region0: #{branch_1_fun.1}
  #allocation0 [shape = 'u32[]', space=smem, size = 0x4, offset = 0x4, fixed_abs, tag = 'smem constant byte address 0x4 - core index']
  #allocation1 [shape = 'u32[144,128]{1,0:T(1,128)}', space=vmem, size = 0x12000, scoped, tag = 'internal scratch']
  #allocation2 [shape = 'f32[1]{0:T(128)S(6)}', space=smem, size = 0x200, scoped, tag = 'scoped memory for branch_1_fun.1']
  %s0 = inlined_call_operand.<no memory space> [shape: f32[1], index: 0, kind: input, shape index: {}]
  %s1 = inlined_call_operand.vmem [shape: f32[4,256], index: 1, kind: input, shape index: {}]
  %s2 = inlined_call_operand.vmem [shape: f32[8,256], index: 2, kind: input, shape index: {}]
  %s3 = inlined_call_operand.vmem [shape: f32[8,256], index: 3, kind: output, shape index: {}]
  %s4 = sld [smem:[#allocation0]]
  $region22: #{branch_1_fun.1} parent=0
    _
  %s6 = ssub.s32 1, %s4
  %s7 = scalar_select 0, %s6, %s4
  %8 = sst [smem:[#allocation2]] %s0
  // Predicated region
  $region2: #{branch_1_fun.1} parent=0 // pred_check
    _
  $region3: #{branch_1_fun.1} parent=0 // pred_check_branch
    %10 = sbr.rel (0) target = $region5
  $region4: #{branch_1_fun.1} parent=0 // pred_region
    _
  $region5: #{branch_1_fun.1} parent=0 // pred_fallthru
    _
  // Predicated region
  $region6: #{branch_1_fun.1} parent=0 // pred_check
    _
  $region7: #{branch_1_fun.1} parent=0 // pred_check_branch
    %12 = sbr.rel (0) target = $region9
  $region8: #{branch_1_fun.1} parent=0 // pred_region
    _
  $region9: #{branch_1_fun.1} parent=0 // pred_fallthru
    _
  // Predicated region
  $region10: #{branch_1_fun.1} parent=0 // pred_check
    _
  $region11: #{branch_1_fun.1} parent=0 // pred_check_branch
    %14 = sbr.rel (0) target = $region13
  $region12: #{branch_1_fun.1} parent=0 // pred_region
    _
  $region13: #{branch_1_fun.1} parent=0 // pred_fallthru
    _
  %v15 = vld [vmem:[%s2] sm:$0xff]
  %v16 = vld [vmem:[%s2 + $0x8] sm:$0xff]
  %s17 = sld [smem:[#allocation2]]
  %v18 = vld [vmem:[%s1] sm:$0xff]
  %v19 = vstv %s17
  %v20 = vmul.f32 %v19, %v15
  %v21 = vmul.f32 %v19, %v16
  %22 = vrot.lane.b32.xlu0 %v15, 1
  %v23 = vpop.permute.xlu0 %22
  %24 = vrot.lane.b32.xlu0 %v16, 1
  %v25 = vpop.permute.xlu0 %24
  %v26 = vlaneseq
  %v27 = vand.u32 %v26, 127
  %vm28 = vcmp.lt.s32.totalorder %v27, 1
  %v29 = vsel %vm28, %v23, %v25
  %v30 = vsel %vm28, %v25, %v23
  %v32 = vlaneseq
  %v33 = vshrl.u32 %v32, 7
  %v34 = vsub.s32 0, %v33
  %v35 = vrot.slane %v18, %v34
  %v36 = vlaneseq
  %v37 = vshrl.u32 %v36, 7
  %v38 = vsub.s32 4, %v37
  %v39 = vrot.slane %v18, %v38
  %v42 = vlaneseq
  %v43 = vshrl.u32 %v42, 7
  %v44 = vsub.s32 0, %v43
  %v45 = vrot.slane %v35, %v44
  %v46 = vlaneseq
  %v47 = vshrl.u32 %v46, 7
  %v48 = vsub.s32 0, %v47
  %v49 = vrot.slane %v39, %v48
  %v50 = vmul.f32 %v45, %v30
  %v51 = vmul.f32 %v49, %v29
  %v52 = vadd.f32 %v20, %v50
  %v53 = vadd.f32 %v21, %v51
  %54 = vrot.lane.b32.xlu0 %v15, 127
  %v55 = vpop.permute.xlu0 %54
  %56 = vrot.lane.b32.xlu0 %v16, 127
  %v57 = vpop.permute.xlu0 %56
  %vm58 = vcmp.lt.s32.totalorder %v27, 127
  %v59 = vsel %vm58, %v55, %v57
  %v60 = vsel %vm58, %v57, %v55
  %v61 = vlaneseq
  %v62 = vshrl.u32 %v61, 7
  %v63 = vsub.s32 1, %v62
  %v64 = vrot.slane %v18, %v63
  %v65 = vlaneseq
  %v66 = vshrl.u32 %v65, 7
  %v67 = vsub.s32 5, %v66
  %v68 = vrot.slane %v18, %v67
  %v71 = vlaneseq
  %v72 = vshrl.u32 %v71, 7
  %v73 = vsub.s32 1, %v72
  %v74 = vrot.slane %v64, %v73
  %v75 = vlaneseq
  %v76 = vshrl.u32 %v75, 7
  %v77 = vsub.s32 1, %v76
  %v78 = vrot.slane %v68, %v77
  %v79 = vmul.f32 %v74, %v59
  %v80 = vmul.f32 %v78, %v60
  %v81 = vadd.f32 %v52, %v79
  %v82 = vadd.f32 %v53, %v80
  %v83 = vmul.f32 %v19, %v81
  %v84 = vmul.f32 %v19, %v82
  %85 = vrot.lane.b32.xlu0 %v81, 16
  %v86 = vpop.permute.xlu0 %85
  %87 = vrot.lane.b32.xlu0 %v82, 16
  %v88 = vpop.permute.xlu0 %87
  %vm89 = vcmp.lt.s32.totalorder %v27, 16
  %v90 = vsel %vm89, %v86, %v88
  %v91 = vsel %vm89, %v88, %v86
  %v92 = vlaneseq
  %v93 = vshrl.u32 %v92, 7
  %v94 = vsub.s32 2, %v93
  %v95 = vrot.slane %v18, %v94
  %v96 = vlaneseq
  %v97 = vshrl.u32 %v96, 7
  %v98 = vsub.s32 6, %v97
  %v99 = vrot.slane %v18, %v98
  %v102 = vlaneseq
  %v103 = vshrl.u32 %v102, 7
  %v104 = vsub.s32 2, %v103
  %v105 = vrot.slane %v95, %v104
  %v106 = vlaneseq
  %v107 = vshrl.u32 %v106, 7
  %v108 = vsub.s32 2, %v107
  %v109 = vrot.slane %v99, %v108
  %v110 = vmul.f32 %v105, %v91
  %v111 = vmul.f32 %v109, %v90
  %v112 = vadd.f32 %v83, %v110
  %v113 = vadd.f32 %v84, %v111
  %114 = vrot.lane.b32.xlu0 %v81, 112
  %v115 = vpop.permute.xlu0 %114
  %116 = vrot.lane.b32.xlu0 %v82, 112
  %v117 = vpop.permute.xlu0 %116
  %vm118 = vcmp.lt.s32.totalorder %v27, 112
  %v119 = vsel %vm118, %v115, %v117
  %v120 = vsel %vm118, %v117, %v115
  %v121 = vlaneseq
  %v122 = vshrl.u32 %v121, 7
  %v123 = vsub.s32 3, %v122
  %v124 = vrot.slane %v18, %v123
  %v125 = vlaneseq
  %v126 = vshrl.u32 %v125, 7
  %v127 = vsub.s32 7, %v126
  %v128 = vrot.slane %v18, %v127
  %v131 = vlaneseq
  %v132 = vshrl.u32 %v131, 7
  %v133 = vsub.s32 3, %v132
  %v134 = vrot.slane %v124, %v133
  %v135 = vlaneseq
  %v136 = vshrl.u32 %v135, 7
  %v137 = vsub.s32 3, %v136
  %v138 = vrot.slane %v128, %v137
  %v139 = vmul.f32 %v134, %v119
  %v140 = vmul.f32 %v138, %v120
  %v141 = vadd.f32 %v112, %v139
  %v142 = vadd.f32 %v113, %v140
  %143 = vst [vmem:[%s3] sm:$0xff] %v141
  %144 = vst [vmem:[%s3 + $0x8] sm:$0xff] %v142
  // Predicated region
  $region14: #{branch_1_fun.1} parent=0 // pred_check
    _
  $region15: #{branch_1_fun.1} parent=0 // pred_check_branch
    %146 = sbr.rel (0) target = $region17
  $region16: #{branch_1_fun.1} parent=0 // pred_region
    _
  $region17: #{branch_1_fun.1} parent=0 // pred_fallthru
    _
  // Predicated region
  $region18: #{branch_1_fun.1} parent=0 // pred_check
    _
  $region19: #{branch_1_fun.1} parent=0 // pred_check_branch
    %148 = sbr.rel (0) target = $region21
  $region20: #{branch_1_fun.1} parent=0 // pred_region
    _
  $region21: #{branch_1_fun.1} parent=0 // pred_fallthru
    _

</llo_original>
